<compile_context>
chip_gen: v6e
topology: v6e:2x2x1
jax: 0.10.0
libtpu: 0.0.40
codegen_flags: <defaults>
</compile_context>

<pallas_src>
import jax
import jax.numpy as jnp
from jax.experimental import pallas as pl
from jax.experimental.pallas import tpu as pltpu


def _drop_mul_kernel(x_ref, r_ref, o_ref):
    # x_ref: (BC, TILE_S) in x.dtype; r_ref: (BC, 1) in the multiply dtype
    # (bf16 on v6e/v7x for bf16 x, f32 otherwise). Only the product is cast
    # back to the output dtype.
    x = x_ref[...].astype(r_ref.dtype)
    o_ref[...] = (x * r_ref[...]).astype(o_ref.dtype)


def _tpu_generation():
    """5 / 6 / 7 from the device kind string; conservative default 6."""
    try:
        kind = jax.devices()[0].device_kind.lower()
    except Exception:
        return 6
    for g in (7, 6, 5):
        if f"v{g}" in kind:
            return g
    return 6


def _densify_factor(bc, s, dtype_bytes):
    """Repeat factor k so (bc*k) fills the native sublane tile.

    Requires S % k == 0 (valid reshape) and (S // k) % 128 == 0 (stay
    lane-dense / unmasked stores); otherwise returns 1.
    """
    native_sublane = max(8, 32 // max(dtype_bytes, 1))  # 8 f32, 16 bf16, 32 int8
    if bc >= native_sublane or s % 128 != 0:
        return 1
    k = 1
    for cand in range(2, 257):
        if bc * cand > 8 * native_sublane:
            break
        if s % cand == 0 and (s // cand) % 128 == 0:
            k = cand
            if bc * cand >= native_sublane:
                break
    return k


def _choose_tile_s(bc, s, dtype_bytes, gen):
    """Lane-dense spatial tile (multiple of 128, or full S), generation-aware."""
    # Block target: pure HBM streaming, so bigger blocks amortise the
    # ~0.35 us per-grid-step pipeline overhead; v7x needs proportionally
    # larger blocks (faster HBM) but has only 64 MiB VMEM per TensorCore.
    target_bytes = (6 if gen >= 7 else 4) * 1024 * 1024
    vmem_cap = (64 if gen >= 7 else 128) * 1024 * 1024
    # Keep double-buffered in+out (~4 * block) at <= 3/4 of physical VMEM.
    target_bytes = min(target_bytes, (vmem_cap * 3 // 4) // 4)

    tile = (target_bytes // max(bc * dtype_bytes, 1)) // 128 * 128
    tile = max(tile, 128)
    s_pad = pl.cdiv(s, 128) * 128
    tile = min(tile, s_pad)

    # Minimum grid-step count: on v7x the "parallel" axis shards across the
    # two TensorCores, so each core should see >= ~3 steps to keep
    # steady-state double buffering; single-core chips only need >= 2.
    min_steps = 6 if gen >= 7 else 2
    if s >= min_steps * 128:
        cap = max(128, (s // min_steps) // 128 * 128)
        tile = min(tile, cap)

    if tile >= s:
        tile = s  # single full-extent block (legal for any S)
    return tile


def drop_layer(x, key, channel_num=None, thr=0.3, training=True, use_pallas=True):
    """Pallas implementation of DropLayer.forward (NCDHW input)."""
    if not training:
        return x

    B, C = x.shape[0], x.shape[1]
    spatial = x.shape[2:]
    if channel_num is None:
        channel_num = C

    # Tiny mask/scale computation (B * channel_num elements) stays in plain
    # JAX: it needs a global sum over the random mask and is negligible work.
    r = jax.random.uniform(key, (B, channel_num), dtype=jnp.float32)
    r = jnp.where(r < thr, 0.0, 1.0)
    r = r * (jnp.float32(channel_num) / (jnp.sum(r) + 0.01))

    if channel_num == 1:
        r = jnp.broadcast_to(r, (B, C))
    elif channel_num != C:
        raise ValueError("channel_num must be 1 or equal to C (PyTorch broadcast rule)")

    if not use_pallas:
        # Preferred at real call sites: plain jnp lets XLA fuse the multiply
        # into the neighboring Conv3d / activation.
        r_b = r.reshape((B, C) + (1,) * len(spatial))
        return (x.astype(jnp.float32) * r_b).astype(x.dtype)

    S = 1
    for d in spatial:
        S *= int(d)
    BC = B * C
    dtype_bytes = x.dtype.itemsize
    gen = _tpu_generation()

    x_flat = x.reshape(BC, S)
    r_flat = r.reshape(BC, 1)  # f32 scale

    # Sublane densification when BC under-fills the native (sublane,128) tile.
    k = _densify_factor(BC, S, dtype_bytes)
    if k > 1:
        x_flat = x_flat.reshape(BC * k, S // k)
        r_flat = jnp.repeat(r_flat, k, axis=0)
        BC, S = BC * k, S // k

    # Multiply in native bf16 on v6e/v7x (VPU supports bf16); f32 elsewhere.
    if x.dtype == jnp.bfloat16 and gen >= 6:
        r_flat = r_flat.astype(jnp.bfloat16)

    tile_s = _choose_tile_s(BC, S, dtype_bytes, gen)
    grid = (pl.cdiv(S, tile_s),)

    block_bytes = BC * tile_s * dtype_bytes
    vmem_cap = (64 if gen >= 7 else 128) * 1024 * 1024
    # 2 buffers x (in + out) blocks + slack; floor at 32 MiB, keep headroom.
    vmem_limit = min(max(4 * block_bytes + (4 << 20), 32 << 20), vmem_cap * 3 // 4)

    out_flat = pl.pallas_call(
        _drop_mul_kernel,
        out_shape=jax.ShapeDtypeStruct((BC, S), x.dtype),
        grid_spec=pl.GridSpec(
            grid=grid,
            in_specs=[
                pl.BlockSpec((BC, tile_s), lambda j: (0, j)),
                pl.BlockSpec((BC, 1), lambda j: (0, 0)),
            ],
            out_specs=pl.BlockSpec((BC, tile_s), lambda j: (0, j)),
        ),
        compiler_params=pltpu.CompilerParams(
            dimension_semantics=("parallel",),
            vmem_limit_bytes=int(vmem_limit),
        ),
        input_output_aliases={0: 0},  # out reuses x_flat's HBM buffer
    )(x_flat, r_flat)

    return out_flat.reshape(x.shape)


def _reference(x, key, channel_num, thr):
    B = x.shape[0]
    r = jax.random.uniform(key, (B, channel_num), dtype=jnp.float32)
    r = jnp.where(r < thr, 0.0, 1.0)
    r = r * (jnp.float32(channel_num) / (jnp.sum(r) + 0.01))
    r = r.reshape(B, channel_num, 1, 1, 1)
    return x * r


if __name__ == "__main__":
    key = jax.random.PRNGKey(0)
    kx, kr = jax.random.split(key)
    thr = 0.3

    # 1) f32, spatial size is a multiple of 128 (exercises multi-step grid).
    B, C, D, H, W = 2, 4, 8, 16, 16
    x = jax.random.normal(kx, (B, C, D, H, W), dtype=jnp.float32)
    out = jax.block_until_ready(drop_layer(x, kr, channel_num=C, thr=thr, training=True))
    ref = _reference(x, kr, C, thr)
    assert out.shape == x.shape
    assert jnp.allclose(out, ref, atol=1e-5, rtol=1e-5), "f32 mismatch vs reference"

    # 2) f32, spatial size NOT a multiple of the tile (masked tail path).
    B2, C2, D2, H2, W2 = 2, 4, 5, 10, 20  # S = 1000
    x2 = jax.random.normal(kx, (B2, C2, D2, H2, W2), dtype=jnp.float32)
    out2 = jax.block_until_ready(drop_layer(x2, kr, channel_num=C2, thr=thr, training=True))
    ref2 = _reference(x2, kr, C2, thr)
    assert jnp.allclose(out2, ref2, atol=1e-5, rtol=1e-5), "non-divisible-S mismatch"

    # 3) bf16 input: exercises sublane densification (BC=8 < 16) and the
    #    native-dtype multiply on v6e/v7x.  Output stays bf16 (documented).
    xb = x.astype(jnp.bfloat16)
    outb = jax.block_until_ready(drop_layer(xb, kr, channel_num=C, thr=thr, training=True))
    refb = _reference(xb, kr, C, thr)  # promotes to f32
    assert jnp.allclose(outb.astype(jnp.float32), refb, atol=2e-2, rtol=2e-2), "bf16 mismatch"

    # 4) channel_num=1 broadcasts one mask value per batch over all channels.
    out1 = jax.block_until_ready(drop_layer(x, kr, channel_num=1, thr=thr, training=True))
    ref1 = _reference(x, kr, 1, thr)
    assert jnp.allclose(out1, ref1, atol=1e-5, rtol=1e-5), "channel_num=1 mismatch"

    # 5) Eval-mode path is identity.
    out_eval = drop_layer(x, kr, channel_num=C, thr=thr, training=False)
    assert jnp.array_equal(out_eval, x)

    # 6) Plain-jnp (fusion-friendly) path matches the Pallas path.
    out_fused = jax.block_until_ready(
        drop_layer(x, kr, channel_num=C, thr=thr, training=True, use_pallas=False))
    assert jnp.allclose(out_fused, out, atol=1e-5, rtol=1e-5), "fused-path mismatch"

    print("KERNEL_OK")
</pallas_src>

<mosaic_0001>
module attributes {stable_mosaic.version = 11 : i64} {
  func.func @_drop_mul_kernel(%arg0: i32, %arg1: memref<8x1024xf32, #tpu.memory_space<vmem>>, %arg2: memref<8x1xf32, #tpu.memory_space<vmem>>, %arg3: memref<8x1024xf32, #tpu.memory_space<vmem>>) attributes {dimension_semantics = [#tpu.dimension_semantics<parallel>], iteration_bounds = array<i64: 2>, scalar_prefetch = 0 : i64, scratch_operands = 0 : i64, tpu.core_type = #tpu.core_type<tc>, window_params = [{transform_indices = @transform_0, window_bounds = array<i64: 8, 1024>}, {pipeline_mode = #tpu.pipeline_mode<synchronous>, transform_indices = @transform_1, window_bounds = array<i64: 8, 1>}, {transform_indices = @transform_2, window_bounds = array<i64: 8, 1024>}]} {
    %c0 = arith.constant 0 : index
    %c0_0 = arith.constant 0 : index
    %0 = vector.load %arg1[%c0, %c0_0] : memref<8x1024xf32, #tpu.memory_space<vmem>>, vector<8x1024xf32>
    %c0_1 = arith.constant 0 : index
    %c0_2 = arith.constant 0 : index
    %1 = vector.load %arg2[%c0_1, %c0_2] : memref<8x1xf32, #tpu.memory_space<vmem>>, vector<8x1xf32>
    %2 = vector.broadcast %1 : vector<8x1xf32> to vector<8x1024xf32>
    %3 = arith.mulf %0, %2 : vector<8x1024xf32>
    %c0_3 = arith.constant 0 : index
    %c0_4 = arith.constant 0 : index
    %4 = vector.load %arg3[%c0_3, %c0_4] : memref<8x1024xf32, #tpu.memory_space<vmem>>, vector<8x1024xf32>
    tpu.vector_store %arg3[%c0_3, %c0_4], %3 {strides = array<i32>} : memref<8x1024xf32, #tpu.memory_space<vmem>>, vector<8x1024xf32>,
    return
  }
  func.func @transform_0(%arg0: i32) -> (i32, i32) {
    %c0_i32 = arith.constant 0 : i32
    %c0_i32_0 = arith.constant 0 : i32
    return %c0_i32, %arg0 : i32, i32
  }
  func.func @transform_1(%arg0: i32) -> (i32, i32) {
    %c0_i32 = arith.constant 0 : i32
    %c0_i32_0 = arith.constant 0 : i32
    %c0_i32_1 = arith.constant 0 : i32
    return %c0_i32, %c0_i32_0 : i32, i32
  }
  func.func @transform_2(%arg0: i32) -> (i32, i32) {
    %c0_i32 = arith.constant 0 : i32
    %c0_i32_0 = arith.constant 0 : i32
    return %c0_i32, %arg0 : i32, i32
  }
}

</mosaic_0001>

<llo_original>
// kernel: tpu_custom_call.1
$region0: #{tpu_custom_call.1}
  #allocation0 [shape = 'u32[]', space=smem, size = 0x4, offset = 0x4, fixed_abs, tag = 'smem constant byte address 0x4 - core index']
  #allocation1 [shape = 'u32[144,128]{1,0:T(1,128)}', space=vmem, size = 0x12000, scoped, tag = 'internal scratch']
  %s0 = inlined_call_operand.hbm [shape: f32[8,2048], index: 0, kind: input, shape index: {}, may-alias: {0,2}]
  %s1 = inlined_call_operand.vmem [shape: f32[8,1], index: 1, kind: input, shape index: {}]
  %s2 = inlined_call_operand.hbm [shape: f32[8,2048], index: 2, kind: output, shape index: {}, may-alias: {0,2}]
  %s3 = sld [smem:[#allocation0]]
  $region45: #{tpu_custom_call.1} parent=0
    _
  %s5 = ssub.s32 1, %s3
  %s6 = scalar_select 0, %s5, %s3
  $region1: #{tpu_custom_call.1} parent=0
    #allocation2 [shape = 'u8[65536]{0}', space=vmem, size = 0x10000, scoped, tag = 'input window, operand 0']
    #allocation3 [shape = 's32[2]{0}', space=sflag, size = 0x8, scoped, tag = 'scoped memory for tpu_custom_call.1']
    #allocation4 [shape = 's32[2]{0}', space=sflag, size = 0x8, scoped, tag = 'scoped memory for tpu_custom_call.1']
    #allocation5 [shape = 'u8[65536]{0}', space=vmem, size = 0x10000, scoped, tag = 'output window, operand 0']
    %7 = vsyncpa [#allocation3], 0
    %s8 = scalar_lea.sflag [#allocation3], 1
    %9 = vsyncpa %s8, 0
    %10 = vsyncpa [#allocation4], 0
    %s11 = scalar_lea.sflag [#allocation4], 1
    %12 = vsyncpa %s11, 0
    loop: start=0, step=1, limit=4
    $region2: #{tpu_custom_call.1} parent=1 // loop_pre_header
      _
    $region3: #{tpu_custom_call.1} parent=1 // loop_header
      %s14 = sphi 0, %s18
      %p15 = scmp.ge.s32.totalorder %s14, 4
      %s24 = sphi 0, %s26
      %s27 = sphi 0, %s24
      %s28 = sphi 0, %s27
      %s44 = sphi 0, %s28
      %s48 = sphi 0, %s48
      %s50 = sphi 0, %s48
      %s51 = sphi 0, %s50
      %s65 = sphi 0, %s51
      %s71 = sphi 0, %s73
      %s74 = sphi 0, %s71
      %s75 = sphi 0, %s74
      %s91 = sphi 0, %s75
    $region4: #{tpu_custom_call.1} parent=1 // loop_header_branch
      %17 = sbr.rel (%p15) target = $region8
    $region5: #{tpu_custom_call.1} parent=1 // loop_body
      %s19 = ssub.s32 %s14, 1
      %s20 = ssub.s32 %s14, 2
      %s21 = sadd.s32 %s14, 1
      %s22 = ssub.s32 %s14, %s21
      %p23 = scmp.eq.s32.totalorder %s22, 0
      %s25 = sadd.s32 %s24, 1
      %s26 = scalar_select %p23, %s24, %s25
      %p29 = pneg %p23
      %p30 = scmp.eq.s32.totalorder %s14, 1
      %p31 = por %p29, %p30
      %p32 = scmp.ne.s32.totalorder %s24, %s27
      %p33 = scmp.eq.s32.totalorder %s14, 0
      %p34 = por %p32, %p33
      %p35 = scmp.ne.s32.totalorder %s24, %s27
      %p36 = scmp.eq.s32.totalorder %s19, 1
      %p37 = por %p35, %p36
      %p38 = scmp.ne.s32.totalorder %s27, %s28
      %p39 = scmp.eq.s32.totalorder %s19, 0
      %p40 = por %p38, %p39
      %p41 = scmp.ne.s32.totalorder %s27, %s28
      %p42 = scmp.eq.s32.totalorder %s20, 1
      %p43 = por %p41, %p42
      %p45 = scmp.ne.s32.totalorder %s28, %s44
      %p46 = scmp.eq.s32.totalorder %s20, 0
      %p47 = por %p45, %p46
      %s49 = sadd.s32 %s48, 1
      %p52 = scmp.eq.s32.totalorder %s14, 1
      %p53 = scmp.ne.s32.totalorder %s48, %s50
      %p54 = scmp.eq.s32.totalorder %s14, 0
      %p55 = por %p53, %p54
      %p56 = scmp.ne.s32.totalorder %s48, %s50
      %p57 = scmp.eq.s32.totalorder %s19, 1
      %p58 = por %p56, %p57
      %p59 = scmp.ne.s32.totalorder %s50, %s51
      %p60 = scmp.eq.s32.totalorder %s19, 0
      %p61 = por %p59, %p60
      %p62 = scmp.ne.s32.totalorder %s50, %s51
      %p63 = scmp.eq.s32.totalorder %s20, 1
      %p64 = por %p62, %p63
      %p66 = scmp.ne.s32.totalorder %s51, %s65
      %p67 = scmp.eq.s32.totalorder %s20, 0
      %p68 = por %p66, %p67
      %s69 = ssub.s32 %s14, %s21
      %p70 = scmp.eq.s32.totalorder %s69, 0
      %s72 = sadd.s32 %s71, 1
      %s73 = scalar_select %p70, %s71, %s72
      %p76 = pneg %p70
      %p77 = scmp.eq.s32.totalorder %s14, 1
      %p78 = por %p76, %p77
      %p79 = scmp.ne.s32.totalorder %s71, %s74
      %p80 = scmp.eq.s32.totalorder %s14, 0
      %p81 = por %p79, %p80
      %p82 = scmp.ne.s32.totalorder %s71, %s74
      %p83 = scmp.eq.s32.totalorder %s19, 1
      %p84 = por %p82, %p83
      %p85 = scmp.ne.s32.totalorder %s74, %s75
      %p86 = scmp.eq.s32.totalorder %s19, 0
      %p87 = por %p85, %p86
      %p88 = scmp.ne.s32.totalorder %s74, %s75
      %p89 = scmp.eq.s32.totalorder %s20, 1
      %p90 = por %p88, %p89
      %p92 = scmp.ne.s32.totalorder %s75, %s91
      %p93 = scmp.eq.s32.totalorder %s20, 0
      %p94 = por %p92, %p93
      %p95 = scmp.le.s32.totalorder 1, %s14
      %p96 = scmp.lt.s32.totalorder %s14, 3
      %p97 = pnand %p95, %p96
      %p98 = pneg %p97
      // Predicated region
      $region9: #{tpu_custom_call.1} parent=5 // pred_check
        _
      $region10: #{tpu_custom_call.1} parent=5 // pred_check_branch
        %100 = sbr.rel (%p97) target = $region12
      $region11: #{tpu_custom_call.1} parent=5 // pred_region
        %s101 = ssub.s32 %s14, 1
        // Predicated region
        $region13: #{tpu_custom_call.1} parent=11 // pred_check
          %p102 = pneg %p61
        $region14: #{tpu_custom_call.1} parent=11 // pred_check_branch
          %104 = sbr.rel (%p102) target = $region16
        $region15: #{tpu_custom_call.1} parent=11 // pred_region
          _
        $region16: #{tpu_custom_call.1} parent=11 // pred_fallthru
          _
      $region12: #{tpu_custom_call.1} parent=5 // pred_fallthru
        _
      %p105 = scmp.lt.s32.totalorder %s14, 2
      // Predicated region
      $region17: #{tpu_custom_call.1} parent=5 // pred_check
        %p106 = pneg %p105
      $region18: #{tpu_custom_call.1} parent=5 // pred_check_branch
        %108 = sbr.rel (%p106) target = $region20
      $region19: #{tpu_custom_call.1} parent=5 // pred_region
        // Predicated region
        $region21: #{tpu_custom_call.1} parent=19 // pred_check
          %p109 = pneg %p34
        $region22: #{tpu_custom_call.1} parent=19 // pred_check_branch
          %111 = sbr.rel (%p109) target = $region24
        $region23: #{tpu_custom_call.1} parent=19 // pred_region
          %s112 = sand.u32 %s24, 1
          %s113 = scalar_lea.sflag [#allocation3], %s112
          %s114 = sand.u32 %s24, 1
          %s115 = smul.addr %s114, 64
          %s116 = scalar_lea.vmem [#allocation2], %s115
          %s117 = smul.u32 8, %s14
          %s119 = ssub.s32 1024, 1024
          %120 = vsyncadd %s113, %s119
          %s121 = smul.addr %s117, 128
          %s122 = scalar_lea.hbm %s0, %s121
          %s124 = sshll.u32 %s116, 4
          %s125 = int_to_ptr.vmem [resolvable:$true] %s124
          %127 = dma.hbm_to_vmem [thread:$0]  %s122, 1024, %s125, %s113
        $region24: #{tpu_custom_call.1} parent=19 // pred_fallthru
          _
      $region20: #{tpu_custom_call.1} parent=5 // pred_fallthru
        _
      %p128 = scmp.le.s32.totalorder 1, %s14
      %p129 = scmp.lt.s32.totalorder %s14, 3
      %p130 = pnand %p128, %p129
      %p131 = pneg %p130
      // Predicated region
      $region25: #{tpu_custom_call.1} parent=5 // pred_check
        _
      $region26: #{tpu_custom_call.1} parent=5 // pred_check_branch
        %133 = sbr.rel (%p130) target = $region28
      $region27: #{tpu_custom_call.1} parent=5 // pred_region
        %s134 = ssub.s32 %s14, 1
        %s135 = sand.u32 %s27, 1
        %s136 = scalar_lea.sflag [#allocation3], %s135
        %s137 = sand.u32 %s27, 1
        %s138 = smul.addr %s137, 64
        %s139 = scalar_lea.vmem [#allocation2], %s138
        // Predicated region
        $region29: #{tpu_custom_call.1} parent=27 // pred_check
          %p140 = pneg %p40
        $region30: #{tpu_custom_call.1} parent=27 // pred_check_branch
          %142 = sbr.rel (%p140) target = $region32
        $region31: #{tpu_custom_call.1} parent=27 // pred_region
          %143 = dma.done %s136, 1024
        $region32: #{tpu_custom_call.1} parent=27 // pred_fallthru
          _
        %s144 = sand.u32 %s27, 1
        %s145 = scalar_lea.sflag [#allocation3], %s144
        %s146 = sand.u32 %s27, 1
        %s147 = smul.addr %s146, 64
        %s148 = scalar_lea.vmem [#allocation2], %s147
        %p149 = pneg %p40
        %p150 = pneg %p37
        %p151 = pneg %p61
        %p152 = pneg %p58
        %p153 = pneg %p87
        %p154 = pneg %p84
        %s155 = sand.u32 %s74, 1
        %s156 = scalar_lea.sflag [#allocation4], %s155
        %s157 = sand.u32 %s74, 1
        %s158 = smul.addr %s157, 64
        %s159 = scalar_lea.vmem [#allocation5], %s158
        %s160 = smul.u32 8, %s19
        %s161 = smul.u32 8, %s19
        %v162 = vld [vmem:[%s139] sm:$0xff]
        %v163 = vld [vmem:[%s139 + $0x8] sm:$0xff]
        %v164 = vld [vmem:[%s139 + $0x10] sm:$0xff]
        %v165 = vld [vmem:[%s139 + $0x18] sm:$0xff]
        %v166 = vld [vmem:[%s139 + $0x20] sm:$0xff]
        %v167 = vld [vmem:[%s139 + $0x28] sm:$0xff]
        %v168 = vld [vmem:[%s139 + $0x30] sm:$0xff]
        %v169 = vld [vmem:[%s139 + $0x38] sm:$0xff]
        %v170 = vld [vmem:[%s1] sm:$0xff]
        %172 = vset.pattern.permute.xlu0 0
        %173 = vperm.xlu0 %172, %v170
        %v174 = vpop.permute.xlu0 %173
        %v176 = vmul.f32 %v162, %v174
        %v177 = vmul.f32 %v163, %v174
        %v178 = vmul.f32 %v164, %v174
        %v179 = vmul.f32 %v165, %v174
        %v180 = vmul.f32 %v166, %v174
        %v181 = vmul.f32 %v167, %v174
        %v182 = vmul.f32 %v168, %v174
        %v183 = vmul.f32 %v169, %v174
        %184 = vst [vmem:[%s159] sm:$0xff] %v176
        %185 = vst [vmem:[%s159 + $0x8] sm:$0xff] %v177
        %186 = vst [vmem:[%s159 + $0x10] sm:$0xff] %v178
        %187 = vst [vmem:[%s159 + $0x18] sm:$0xff] %v179
        %188 = vst [vmem:[%s159 + $0x20] sm:$0xff] %v180
        %189 = vst [vmem:[%s159 + $0x28] sm:$0xff] %v181
        %190 = vst [vmem:[%s159 + $0x30] sm:$0xff] %v182
        %191 = vst [vmem:[%s159 + $0x38] sm:$0xff] %v183
        %s192 = sand.u32 %s74, 1
        %s193 = scalar_lea.sflag [#allocation4], %s192
        %s194 = sand.u32 %s74, 1
        %s195 = smul.addr %s194, 64
        %s196 = scalar_lea.vmem [#allocation5], %s195
        // Predicated region
        $region33: #{tpu_custom_call.1} parent=27 // pred_check
          %p197 = pneg %p84
        $region34: #{tpu_custom_call.1} parent=27 // pred_check_branch
          %199 = sbr.rel (%p197) target = $region36
        $region35: #{tpu_custom_call.1} parent=27 // pred_region
          %s200 = smul.u32 8, %s19
          %s202 = ssub.s32 1024, 1024
          %203 = vsyncadd %s193, %s202
          %s204 = smul.addr %s200, 128
          %s205 = scalar_lea.hbm %s2, %s204
          %s207 = sshll.u32 %s196, 4
          %s208 = int_to_ptr.vmem [resolvable:$true] %s207
          %210 = dma.vmem_to_hbm [thread:$0]  %s208, 1024, %s205, %s193
        $region36: #{tpu_custom_call.1} parent=27 // pred_fallthru
          _
      $region28: #{tpu_custom_call.1} parent=5 // pred_fallthru
        _
      %p211 = scmp.le.s32.totalorder 2, %s14
      // Predicated region
      $region37: #{tpu_custom_call.1} parent=5 // pred_check
        %p212 = pneg %p211
      $region38: #{tpu_custom_call.1} parent=5 // pred_check_branch
        %214 = sbr.rel (%p212) target = $region40
      $region39: #{tpu_custom_call.1} parent=5 // pred_region
        %s215 = ssub.s32 %s14, 2
        // Predicated region
        $region41: #{tpu_custom_call.1} parent=39 // pred_check
          %p216 = pneg %p90
        $region42: #{tpu_custom_call.1} parent=39 // pred_check_branch
          %218 = sbr.rel (%p216) target = $region44
        $region43: #{tpu_custom_call.1} parent=39 // pred_region
          %s219 = sand.u32 %s75, 1
          %s220 = scalar_lea.sflag [#allocation4], %s219
          %s221 = sand.u32 %s75, 1
          %s222 = smul.addr %s221, 64
          %s223 = scalar_lea.vmem [#allocation5], %s222
          %224 = dma.done %s220, 1024
        $region44: #{tpu_custom_call.1} parent=39 // pred_fallthru
          _
      $region40: #{tpu_custom_call.1} parent=5 // pred_fallthru
        _
    $region6: #{tpu_custom_call.1} parent=1 // loop_footer
      %s18 = sadd.s32 1, %s14
    $region7: #{tpu_custom_call.1} parent=1 // loop_footer_branch
      %13 = sbr.rel target = $region3
    $region8: #{tpu_custom_call.1} parent=1 // loop_exit
      _
    %225 = vsyncpa [#allocation3], 1
    %s226 = scalar_lea.sflag [#allocation3], 1
    %227 = vsyncpa %s226, 1
    %228 = vsyncpa [#allocation4], 1
    %s229 = scalar_lea.sflag [#allocation4], 1
    %230 = vsyncpa %s229, 1

</llo_original>
